<compile_context>
chip_gen: v7x
topology: tpu7x:2x2x1
jax: 0.10.0
libtpu: 0.0.40
codegen_flags: <defaults>
</compile_context>

<pallas_src>
import functools

import jax
import jax.numpy as jnp
from jax.experimental import pallas as pl
from jax.experimental.pallas import tpu as pltpu

EPS = 1e-5


def _ceil_div(a, b):
    return -(-a // b)


def _round_up(a, b):
    return _ceil_div(a, b) * b


def _vmem_budgets():
    """Generation-aware VMEM budgets (v5e/v6e: 128 MiB physical, v7x: 64 MiB)."""
    cap = 64 * 1024 * 1024                      # conservative fallback (v7x)
    try:
        cap = int(pltpu.get_tpu_info().vmem_capacity_bytes)
    except Exception:
        pass
    vmem_limit = (cap * 3) // 4                 # leave headroom for compiler scratch
    tile_budget = cap // 2                      # ~4 live (rows, td) buffers fit here
    return vmem_limit, tile_budget


# --------------------------------------------------------------------------
# fused path: whole (padded) batch in one (N_pad, td) block -> x read from
# HBM exactly once.  Row chunks are streamed so f32 temporaries stay bounded.
# --------------------------------------------------------------------------
def _bn1d_fused_kernel(x_ref, gamma_ref, beta_ref, y_ref, mu_ref, var_ref, *,
                       n_valid, chunk_rows):
    n_rows = x_ref.shape[0]
    n_chunks = n_rows // chunk_rows
    rem = n_rows % chunk_rows

    # pass A: accumulate sum / sum-of-squares into the resident (1, td) outputs
    mu_ref[...] = jnp.zeros_like(mu_ref)          # running sum
    var_ref[...] = jnp.zeros_like(var_ref)        # running sum of squares

    def _accum(start, rows):
        xr = x_ref[pl.ds(start, rows), :].astype(jnp.float32)
        mu_ref[...] += jnp.sum(xr, axis=0, keepdims=True)
        var_ref[...] += jnp.sum(xr * xr, axis=0, keepdims=True)

    if n_chunks > 0:
        @pl.loop(0, n_chunks)
        def _(i):
            _accum(pl.multiple_of(i * chunk_rows, chunk_rows), chunk_rows)
    if rem > 0:
        _accum(n_chunks * chunk_rows, rem)

    # finalize statistics (unbiased var, clamped against f32 cancellation)
    n = jnp.float32(n_valid)
    mu = mu_ref[...] / n
    var = jnp.maximum((var_ref[...] - n * mu * mu) / (n - 1.0), 0.0)
    mu_ref[...] = mu
    var_ref[...] = var
    scale = gamma_ref[...] * jax.lax.rsqrt(var + EPS)
    shift = beta_ref[...] - mu * scale

    # pass B: normalize row chunks and stream them straight to y_ref
    def _write(start, rows):
        xr = x_ref[pl.ds(start, rows), :].astype(jnp.float32)
        y_ref[pl.ds(start, rows), :] = (xr * scale + shift).astype(y_ref.dtype)

    if n_chunks > 0:
        @pl.loop(0, n_chunks)
        def _(i):
            _write(pl.multiple_of(i * chunk_rows, chunk_rows), chunk_rows)
    if rem > 0:
        _write(n_chunks * chunk_rows, rem)


# --------------------------------------------------------------------------
# batch-tiled two-pass path (large N): pass 1 accumulates sum/sumsq over the
# N grid axis directly in the resident output blocks; the finalize step folds
# the affine into (scale, shift).
# --------------------------------------------------------------------------
def _bn1d_stats_kernel(x_ref, gamma_ref, beta_ref,
                       mu_ref, var_ref, scale_ref, shift_ref, *, n_valid):
    k = pl.program_id(1)

    @pl.when(k == 0)
    def _():
        mu_ref[...] = jnp.zeros_like(mu_ref)      # running sum
        var_ref[...] = jnp.zeros_like(var_ref)    # running sum of squares

    x = x_ref[...].astype(jnp.float32)            # (tn, td)
    mu_ref[...] += jnp.sum(x, axis=0, keepdims=True)
    var_ref[...] += jnp.sum(x * x, axis=0, keepdims=True)

    @pl.when(k == pl.num_programs(1) - 1)
    def _():
        n = jnp.float32(n_valid)
        mu = mu_ref[...] / n
        var = jnp.maximum((var_ref[...] - n * mu * mu) / (n - 1.0), 0.0)
        scale = gamma_ref[...] * jax.lax.rsqrt(var + EPS)
        mu_ref[...] = mu
        var_ref[...] = var
        scale_ref[...] = scale
        shift_ref[...] = beta_ref[...] - mu * scale


# pass 2: y = x * scale + shift (fully parallel over both grid axes)
def _bn1d_norm_kernel(x_ref, scale_ref, shift_ref, y_ref):
    x = x_ref[...].astype(jnp.float32)
    y_ref[...] = (x * scale_ref[...] + shift_ref[...]).astype(y_ref.dtype)


# --------------------------------------------------------------------------
# tile selection
# --------------------------------------------------------------------------
def _pick_td(D, approx_rows, itemsize, *, max_td=1024, target_steps=8,
             min_block_bytes=1 << 20):
    """D is already a multiple of 128.  Prefer >= target_steps grid steps along
    D (pipelining + megacore) while keeping each block >= ~1 MiB."""
    divs = [c for c in range(128, min(D, max_td) + 1, 128) if D % c == 0]
    if not divs:
        return D
    good = [c for c in divs if D // c >= target_steps]
    td = max(good) if good else min(divs)
    # widen tiny blocks (per-grid-step overhead dominated) but keep >= 2 steps
    while approx_rows * td * itemsize < min_block_bytes:
        bigger = [c for c in divs if c > td and D // c >= 2]
        if not bigger:
            break
        td = min(bigger)
    return td


def _pick_tn(N, sub, cap_rows):
    """Sublane-aligned batch tile near the VMEM row cap; N is padded up to a
    multiple of it afterwards (so awkward divisors of N never shrink tn)."""
    n_tiles = _ceil_div(N, cap_rows)
    return min(cap_rows, _round_up(_ceil_div(N, n_tiles), sub))


# --------------------------------------------------------------------------
# wrapper
# --------------------------------------------------------------------------
def batchnorm1d_forward(x, gamma, beta, *, td=None, tn=None,
                        vmem_limit_bytes=None, tile_budget_bytes=None):
    """Forward of batchnorm1d (training mode, first call t=1).

    Returns (y, mu, var).  The torch module's running-buffer / t update is
    host-side Python state; callers apply it with the returned mu/var.
    """
    N, D = x.shape
    assert N >= 2, "unbiased variance (torch.var default) requires N >= 2"

    itemsize = jnp.dtype(x.dtype).itemsize
    sub = 16 if itemsize == 2 else 8              # bf16 packs 16 sublanes

    auto_vl, auto_tb = _vmem_budgets()
    if vmem_limit_bytes is None:
        vmem_limit_bytes = auto_vl
    if tile_budget_bytes is None:
        tile_budget_bytes = auto_tb

    # lane-dense feature tiling: pad D up to a multiple of 128
    D_pad = _round_up(D, 128)
    if td is None:
        td = _pick_td(D_pad, min(_round_up(N, sub), 1024), itemsize)
    assert D_pad % td == 0, "feature tile must divide the (padded) feature dim"

    # VMEM row cap: ~4 live (rows, td) buffers (x + y, double-buffered)
    cap_rows = max(sub, (tile_budget_bytes // (4 * td * itemsize)) // sub * sub)

    if tn is None:
        n_sub = _round_up(N, sub)
        tn = n_sub if n_sub <= cap_rows else _pick_tn(N, sub, cap_rows)
    N_pad = _round_up(N, tn)

    # in-kernel streaming chunk for the fused path (~128 KiB of f32 temps)
    chunk_rows = max(sub, ((128 * 1024) // (td * 4)) // sub * sub)

    # zero-pad: zero rows / cols contribute nothing to sum or sumsq, so the
    # statistics (computed with n_valid = N) stay exact; outputs are sliced.
    x_p = x
    if N_pad != N or D_pad != D:
        x_p = jnp.pad(x, ((0, N_pad - N), (0, D_pad - D)))
    gamma_p = gamma.astype(jnp.float32)
    beta_p = beta.astype(jnp.float32)
    if D_pad != D:
        gamma_p = jnp.pad(gamma_p, (0, D_pad - D))
        beta_p = jnp.pad(beta_p, (0, D_pad - D))
    gamma2 = gamma_p.reshape(1, D_pad)
    beta2 = beta_p.reshape(1, D_pad)

    bytes_x = N_pad * D_pad * itemsize
    n_dt = D_pad // td

    if tn == N_pad:
        # ---- fused single sweep: x is streamed from HBM exactly once ----
        y, mu, var = pl.pallas_call(
            functools.partial(_bn1d_fused_kernel, n_valid=N,
                              chunk_rows=chunk_rows),
            out_shape=(
                jax.ShapeDtypeStruct((N_pad, D_pad), x.dtype),
                jax.ShapeDtypeStruct((1, D_pad), jnp.float32),
                jax.ShapeDtypeStruct((1, D_pad), jnp.float32),
            ),
            grid_spec=pltpu.PrefetchScalarGridSpec(
                num_scalar_prefetch=0,
                grid=(n_dt,),
                in_specs=[
                    pl.BlockSpec((N_pad, td), lambda j: (0, j)),
                    pl.BlockSpec((1, td), lambda j: (0, j)),
                    pl.BlockSpec((1, td), lambda j: (0, j)),
                ],
                out_specs=(
                    pl.BlockSpec((N_pad, td), lambda j: (0, j)),
                    pl.BlockSpec((1, td), lambda j: (0, j)),
                    pl.BlockSpec((1, td), lambda j: (0, j)),
                ),
            ),
            compiler_params=pltpu.CompilerParams(
                dimension_semantics=("parallel",),
                vmem_limit_bytes=vmem_limit_bytes,
            ),
            cost_estimate=pl.CostEstimate(
                flops=6 * N_pad * D_pad,
                transcendentals=D_pad,
                bytes_accessed=2 * bytes_x,
            ),
        )(x_p, gamma2, beta2)
    else:
        # ---- batch-tiled two-pass path (large N): stats then normalize ----
        mu, var, scale, shift = pl.pallas_call(
            functools.partial(_bn1d_stats_kernel, n_valid=N),
            out_shape=(
                jax.ShapeDtypeStruct((1, D_pad), jnp.float32),
                jax.ShapeDtypeStruct((1, D_pad), jnp.float32),
                jax.ShapeDtypeStruct((1, D_pad), jnp.float32),
                jax.ShapeDtypeStruct((1, D_pad), jnp.float32),
            ),
            grid_spec=pltpu.PrefetchScalarGridSpec(
                num_scalar_prefetch=0,
                grid=(n_dt, N_pad // tn),          # reduction axis (N) last
                in_specs=[
                    pl.BlockSpec((tn, td), lambda j, k: (k, j)),
                    pl.BlockSpec((1, td), lambda j, k: (0, j)),
                    pl.BlockSpec((1, td), lambda j, k: (0, j)),
                ],
                out_specs=(
                    pl.BlockSpec((1, td), lambda j, k: (0, j)),
                    pl.BlockSpec((1, td), lambda j, k: (0, j)),
                    pl.BlockSpec((1, td), lambda j, k: (0, j)),
                    pl.BlockSpec((1, td), lambda j, k: (0, j)),
                ),
            ),
            compiler_params=pltpu.CompilerParams(
                dimension_semantics=("parallel", "arbitrary"),
                vmem_limit_bytes=vmem_limit_bytes,
            ),
            cost_estimate=pl.CostEstimate(
                flops=3 * N_pad * D_pad,
                transcendentals=D_pad,
                bytes_accessed=bytes_x,
            ),
        )(x_p, gamma2, beta2)

        y = pl.pallas_call(
            _bn1d_norm_kernel,
            out_shape=jax.ShapeDtypeStruct((N_pad, D_pad), x.dtype),
            grid_spec=pltpu.PrefetchScalarGridSpec(
                num_scalar_prefetch=0,
                grid=(n_dt, N_pad // tn),
                in_specs=[
                    pl.BlockSpec((tn, td), lambda j, k: (k, j)),
                    pl.BlockSpec((1, td), lambda j, k: (0, j)),
                    pl.BlockSpec((1, td), lambda j, k: (0, j)),
                ],
                out_specs=pl.BlockSpec((tn, td), lambda j, k: (k, j)),
            ),
            compiler_params=pltpu.CompilerParams(
                dimension_semantics=("parallel", "parallel"),
                vmem_limit_bytes=vmem_limit_bytes,
            ),
            cost_estimate=pl.CostEstimate(
                flops=2 * N_pad * D_pad,
                transcendentals=0,
                bytes_accessed=2 * bytes_x,
            ),
        )(x_p, scale, shift)

    if N_pad != N or D_pad != D:
        y = y[:N, :D]
    return y, mu[0, :D], var[0, :D]


# TODO(synk): the module's running-buffer update (self.mu/self.var/self.t) is
# host-side Python state; callers update those buffers with the returned mu/var.

if __name__ == "__main__":
    key = jax.random.PRNGKey(0)
    k1, k2, k3 = jax.random.split(key, 3)

    def _check(x, gamma, beta, y, mu, var):
        N = x.shape[0]
        mu_ref = jnp.mean(x, axis=0)
        var_ref = jnp.sum((x - mu_ref) ** 2, axis=0) / (N - 1)
        y_ref = (x - mu_ref) / jnp.sqrt(var_ref + EPS) * gamma + beta
        assert jnp.allclose(y, y_ref, atol=1e-4, rtol=1e-5)
        assert jnp.allclose(mu, mu_ref, atol=1e-5)
        assert jnp.allclose(var, var_ref, atol=1e-4)

    # Case 1: small shape -> fused single-sweep path (batch fits one block).
    N1, D1 = 8, 256
    x1 = jax.random.normal(k1, (N1, D1), dtype=jnp.float32)
    gamma1 = jnp.ones((D1,), dtype=jnp.float32)     # nn.Parameter(torch.ones(dim))
    beta1 = jnp.zeros((D1,), dtype=jnp.float32)     # nn.Parameter(torch.zeros(dim))
    y1, mu1, var1 = batchnorm1d_forward(x1, gamma1, beta1)
    jax.block_until_ready(y1)
    _check(x1, gamma1, beta1, y1, mu1, var1)

    # Case 2: force the batch-tiled two-pass path (stats accumulation grid).
    N2, D2 = 64, 512
    x2 = jax.random.normal(k2, (N2, D2), dtype=jnp.float32) + 3.0
    gamma2 = 0.5 + jax.random.uniform(k1, (D2,), dtype=jnp.float32)
    beta2 = 0.1 * jax.random.normal(k2, (D2,), dtype=jnp.float32)
    y2, mu2, var2 = batchnorm1d_forward(x2, gamma2, beta2, td=128, tn=16)
    jax.block_until_ready(y2)
    _check(x2, gamma2, beta2, y2, mu2, var2)

    # Case 3: ragged N and D -> exercises the zero-padding / slicing path.
    N3, D3 = 10, 192
    x3 = jax.random.normal(k3, (N3, D3), dtype=jnp.float32)
    gamma3 = jnp.ones((D3,), dtype=jnp.float32)
    beta3 = jnp.zeros((D3,), dtype=jnp.float32)
    y3, mu3, var3 = batchnorm1d_forward(x3, gamma3, beta3)
    jax.block_until_ready(y3)
    _check(x3, gamma3, beta3, y3, mu3, var3)

    print("KERNEL_OK")
</pallas_src>

<mosaic_0001>
module attributes {stable_mosaic.version = 11 : i64} {
  func.func @_bn1d_fused_kernel(%arg0: i32, %arg1: memref<8x128xf32, #tpu.memory_space<vmem>>, %arg2: memref<1x128xf32, #tpu.memory_space<vmem>>, %arg3: memref<1x128xf32, #tpu.memory_space<vmem>>, %arg4: memref<8x128xf32, #tpu.memory_space<vmem>>, %arg5: memref<1x128xf32, #tpu.memory_space<vmem>>, %arg6: memref<1x128xf32, #tpu.memory_space<vmem>>) attributes {dimension_semantics = [#tpu.dimension_semantics<parallel>], iteration_bounds = array<i64: 2>, scalar_prefetch = 0 : i64, scratch_operands = 0 : i64, tpu.core_type = #tpu.core_type<tc>, window_params = [{transform_indices = @transform_0, window_bounds = array<i64: 8, 128>}, {transform_indices = @transform_1, window_bounds = array<i64: 1, 128>}, {transform_indices = @transform_2, window_bounds = array<i64: 1, 128>}, {transform_indices = @transform_3, window_bounds = array<i64: 8, 128>}, {transform_indices = @transform_4, window_bounds = array<i64: 1, 128>}, {transform_indices = @transform_5, window_bounds = array<i64: 1, 128>}]} {
    %cst = arith.constant 0.000000e+00 : f32
    %0 = vector.broadcast %cst : f32 to vector<1x128xf32>
    %c0 = arith.constant 0 : index
    %c0_0 = arith.constant 0 : index
    %1 = vector.load %arg5[%c0, %c0_0] : memref<1x128xf32, #tpu.memory_space<vmem>>, vector<1x128xf32>
    tpu.vector_store %arg5[%c0, %c0_0], %0 {strides = array<i32>} : memref<1x128xf32, #tpu.memory_space<vmem>>, vector<1x128xf32>,
    %cst_1 = arith.constant 0.000000e+00 : f32
    %2 = vector.broadcast %cst_1 : f32 to vector<1x128xf32>
    %c0_2 = arith.constant 0 : index
    %c0_3 = arith.constant 0 : index
    %3 = vector.load %arg6[%c0_2, %c0_3] : memref<1x128xf32, #tpu.memory_space<vmem>>, vector<1x128xf32>
    tpu.vector_store %arg6[%c0_2, %c0_3], %2 {strides = array<i32>} : memref<1x128xf32, #tpu.memory_space<vmem>>, vector<1x128xf32>,
    %c0_4 = arith.constant 0 : index
    %c0_5 = arith.constant 0 : index
    %4 = vector.load %arg1[%c0_4, %c0_5] : memref<8x128xf32, #tpu.memory_space<vmem>>, vector<8x128xf32>
    %c0_6 = arith.constant 0 : index
    %c0_7 = arith.constant 0 : index
    %5 = vector.load %arg5[%c0_6, %c0_7] : memref<1x128xf32, #tpu.memory_space<vmem>>, vector<1x128xf32>
    %cst_8 = arith.constant dense<0.000000e+00> : vector<128xf32>
    %6 = vector.multi_reduction <add>, %4, %cst_8 [0] : vector<8x128xf32> to vector<128xf32>
    %7 = vector.shape_cast %6 : vector<128xf32> to vector<1x128xf32>
    %8 = arith.addf %5, %7 : vector<1x128xf32>
    %c0_9 = arith.constant 0 : index
    %c0_10 = arith.constant 0 : index
    %9 = vector.load %arg5[%c0_9, %c0_10] : memref<1x128xf32, #tpu.memory_space<vmem>>, vector<1x128xf32>
    tpu.vector_store %arg5[%c0_9, %c0_10], %8 {strides = array<i32>} : memref<1x128xf32, #tpu.memory_space<vmem>>, vector<1x128xf32>,
    %c0_11 = arith.constant 0 : index
    %c0_12 = arith.constant 0 : index
    %10 = vector.load %arg6[%c0_11, %c0_12] : memref<1x128xf32, #tpu.memory_space<vmem>>, vector<1x128xf32>
    %11 = arith.mulf %4, %4 : vector<8x128xf32>
    %cst_13 = arith.constant dense<0.000000e+00> : vector<128xf32>
    %12 = vector.multi_reduction <add>, %11, %cst_13 [0] : vector<8x128xf32> to vector<128xf32>
    %13 = vector.shape_cast %12 : vector<128xf32> to vector<1x128xf32>
    %14 = arith.addf %10, %13 : vector<1x128xf32>
    %c0_14 = arith.constant 0 : index
    %c0_15 = arith.constant 0 : index
    %15 = vector.load %arg6[%c0_14, %c0_15] : memref<1x128xf32, #tpu.memory_space<vmem>>, vector<1x128xf32>
    tpu.vector_store %arg6[%c0_14, %c0_15], %14 {strides = array<i32>} : memref<1x128xf32, #tpu.memory_space<vmem>>, vector<1x128xf32>,
    %c0_16 = arith.constant 0 : index
    %c0_17 = arith.constant 0 : index
    %16 = vector.load %arg5[%c0_16, %c0_17] : memref<1x128xf32, #tpu.memory_space<vmem>>, vector<1x128xf32>
    %cst_18 = arith.constant 8.000000e+00 : f32
    %17 = vector.broadcast %cst_18 : f32 to vector<1x128xf32>
    %18 = arith.divf %16, %17 : vector<1x128xf32>
    %c0_19 = arith.constant 0 : index
    %c0_20 = arith.constant 0 : index
    %19 = vector.load %arg6[%c0_19, %c0_20] : memref<1x128xf32, #tpu.memory_space<vmem>>, vector<1x128xf32>
    %cst_21 = arith.constant 8.000000e+00 : f32
    %20 = vector.broadcast %cst_21 : f32 to vector<1x128xf32>
    %21 = arith.mulf %20, %18 : vector<1x128xf32>
    %22 = arith.mulf %21, %18 : vector<1x128xf32>
    %23 = arith.subf %19, %22 : vector<1x128xf32>
    %cst_22 = arith.constant 8.000000e+00 : f32
    %cst_23 = arith.constant 1.000000e+00 : f32
    %24 = arith.subf %cst_22, %cst_23 : f32
    %25 = vector.broadcast %24 : f32 to vector<1x128xf32>
    %26 = arith.divf %23, %25 : vector<1x128xf32>
    %cst_24 = arith.constant 0.000000e+00 : f32
    %27 = vector.broadcast %cst_24 : f32 to vector<1x128xf32>
    %28 = arith.maximumf %26, %27 : vector<1x128xf32>
    %c0_25 = arith.constant 0 : index
    %c0_26 = arith.constant 0 : index
    %29 = vector.load %arg5[%c0_25, %c0_26] : memref<1x128xf32, #tpu.memory_space<vmem>>, vector<1x128xf32>
    tpu.vector_store %arg5[%c0_25, %c0_26], %18 {strides = array<i32>} : memref<1x128xf32, #tpu.memory_space<vmem>>, vector<1x128xf32>,
    %c0_27 = arith.constant 0 : index
    %c0_28 = arith.constant 0 : index
    %30 = vector.load %arg6[%c0_27, %c0_28] : memref<1x128xf32, #tpu.memory_space<vmem>>, vector<1x128xf32>
    tpu.vector_store %arg6[%c0_27, %c0_28], %28 {strides = array<i32>} : memref<1x128xf32, #tpu.memory_space<vmem>>, vector<1x128xf32>,
    %c0_29 = arith.constant 0 : index
    %c0_30 = arith.constant 0 : index
    %31 = vector.load %arg2[%c0_29, %c0_30] : memref<1x128xf32, #tpu.memory_space<vmem>>, vector<1x128xf32>
    %cst_31 = arith.constant 9.99999974E-6 : f32
    %32 = vector.broadcast %cst_31 : f32 to vector<1x128xf32>
    %33 = arith.addf %28, %32 : vector<1x128xf32>
    %34 = math.rsqrt %33 : vector<1x128xf32>
    %35 = arith.mulf %31, %34 : vector<1x128xf32>
    %c0_32 = arith.constant 0 : index
    %c0_33 = arith.constant 0 : index
    %36 = vector.load %arg3[%c0_32, %c0_33] : memref<1x128xf32, #tpu.memory_space<vmem>>, vector<1x128xf32>
    %37 = arith.mulf %18, %35 : vector<1x128xf32>
    %38 = arith.subf %36, %37 : vector<1x128xf32>
    %c0_34 = arith.constant 0 : index
    %c0_35 = arith.constant 0 : index
    %39 = vector.load %arg1[%c0_34, %c0_35] : memref<8x128xf32, #tpu.memory_space<vmem>>, vector<8x128xf32>
    %40 = vector.broadcast %35 : vector<1x128xf32> to vector<8x128xf32>
    %41 = arith.mulf %39, %40 : vector<8x128xf32>
    %42 = vector.broadcast %38 : vector<1x128xf32> to vector<8x128xf32>
    %43 = arith.addf %41, %42 : vector<8x128xf32>
    %c0_36 = arith.constant 0 : index
    %c0_37 = arith.constant 0 : index
    %44 = vector.load %arg4[%c0_36, %c0_37] : memref<8x128xf32, #tpu.memory_space<vmem>>, vector<8x128xf32>
    tpu.vector_store %arg4[%c0_36, %c0_37], %43 {strides = array<i32>} : memref<8x128xf32, #tpu.memory_space<vmem>>, vector<8x128xf32>,
    return
  }
  func.func @transform_0(%arg0: i32) -> (i32, i32) {
    %c0_i32 = arith.constant 0 : i32
    %c0_i32_0 = arith.constant 0 : i32
    return %c0_i32, %arg0 : i32, i32
  }
  func.func @transform_1(%arg0: i32) -> (i32, i32) {
    %c0_i32 = arith.constant 0 : i32
    %c0_i32_0 = arith.constant 0 : i32
    return %c0_i32, %arg0 : i32, i32
  }
  func.func @transform_2(%arg0: i32) -> (i32, i32) {
    %c0_i32 = arith.constant 0 : i32
    %c0_i32_0 = arith.constant 0 : i32
    return %c0_i32, %arg0 : i32, i32
  }
  func.func @transform_3(%arg0: i32) -> (i32, i32) {
    %c0_i32 = arith.constant 0 : i32
    %c0_i32_0 = arith.constant 0 : i32
    return %c0_i32, %arg0 : i32, i32
  }
  func.func @transform_4(%arg0: i32) -> (i32, i32) {
    %c0_i32 = arith.constant 0 : i32
    %c0_i32_0 = arith.constant 0 : i32
    return %c0_i32, %arg0 : i32, i32
  }
  func.func @transform_5(%arg0: i32) -> (i32, i32) {
    %c0_i32 = arith.constant 0 : i32
    %c0_i32_0 = arith.constant 0 : i32
    return %c0_i32, %arg0 : i32, i32
  }
}

</mosaic_0001>

<llo_original>
// kernel: tpu_custom_call.1
$region0: #{tpu_custom_call.1}
  #allocation0 [shape = 'u32[]', space=smem, size = 0x4, offset = 0x4, fixed_abs, tag = 'smem constant byte address 0x4 - core index']
  #allocation1 [shape = 'u32[144,128]{1,0:T(1,128)}', space=vmem, size = 0x12000, scoped, tag = 'internal scratch']
  %s0 = inlined_call_operand.hbm [shape: f32[8,256], index: 0, kind: input, shape index: {}]
  %s1 = inlined_call_operand.vmem [shape: f32[1,256], index: 1, kind: input, shape index: {}]
  %s2 = inlined_call_operand.vmem [shape: f32[1,256], index: 2, kind: input, shape index: {}]
  %s3 = inlined_call_operand.hbm [shape: f32[8,256], index: 3, kind: output, shape index: {0}]
  %s4 = inlined_call_operand.hbm [shape: f32[1,256], index: 4, kind: output, shape index: {1}]
  %s5 = inlined_call_operand.hbm [shape: f32[1,256], index: 5, kind: output, shape index: {2}]
  %6 = xla_tuple %s3, %s4, %s5
  %s7 = sld [smem:[#allocation0]]
  $region65: #{tpu_custom_call.1} parent=0
    _
  %s9 = ssub.s32 1, %s7
  %s10 = scalar_select 0, %s9, %s7
  $region1: #{tpu_custom_call.1} parent=0
    #allocation2 [shape = 'u8[8192]{0}', space=vmem, size = 0x2000, scoped, tag = 'input window, operand 0']
    #allocation3 [shape = 's32[2]{0}', space=sflag, size = 0x8, scoped, tag = 'scoped memory for tpu_custom_call.1']
    #allocation4 [shape = 's32[2]{0}', space=sflag, size = 0x8, scoped, tag = 'scoped memory for tpu_custom_call.1']
    #allocation5 [shape = 'u8[8192]{0}', space=vmem, size = 0x2000, scoped, tag = 'output window, operand 0']
    #allocation6 [shape = 'u8[1024]{0}', space=vmem, size = 0x400, scoped, tag = 'output window, operand 1']
    #allocation7 [shape = 's32[2]{0}', space=sflag, size = 0x8, scoped, tag = 'scoped memory for tpu_custom_call.1']
    #allocation8 [shape = 'u8[1024]{0}', space=vmem, size = 0x400, scoped, tag = 'output window, operand 2']
    %11 = vsyncpa [#allocation3], 0
    %s12 = scalar_lea.sflag [#allocation3], 1
    %13 = vsyncpa %s12, 0
    %14 = vsyncpa [#allocation4], 0
    %s15 = scalar_lea.sflag [#allocation4], 1
    %16 = vsyncpa %s15, 0
    %17 = vsyncpa [#allocation7], 0
    %s18 = scalar_lea.sflag [#allocation7], 1
    %19 = vsyncpa %s18, 0
    loop: start=0, step=1, limit=4
    $region2: #{tpu_custom_call.1} parent=1 // loop_pre_header
      _
    $region3: #{tpu_custom_call.1} parent=1 // loop_header
      %s21 = sphi 0, %s25
      %p22 = scmp.ge.s32.totalorder %s21, 4
      %s31 = sphi 0, %s33
      %s34 = sphi 0, %s31
      %s35 = sphi 0, %s34
      %s51 = sphi 0, %s35
      %s57 = sphi 0, %s59
      %s60 = sphi 0, %s57
      %s61 = sphi 0, %s60
      %s77 = sphi 0, %s61
      %s83 = sphi 0, %s85
      %s86 = sphi 0, %s83
      %s87 = sphi 0, %s86
      %s103 = sphi 0, %s87
      %s109 = sphi 0, %s111
      %s112 = sphi 0, %s109
      %s113 = sphi 0, %s112
      %s129 = sphi 0, %s113
      %s135 = sphi 0, %s137
      %s138 = sphi 0, %s135
      %s139 = sphi 0, %s138
      %s155 = sphi 0, %s139
      %s161 = sphi 0, %s163
      %s164 = sphi 0, %s161
      %s165 = sphi 0, %s164
      %s181 = sphi 0, %s165
    $region4: #{tpu_custom_call.1} parent=1 // loop_header_branch
      %24 = sbr.rel (%p22) target = $region8
    $region5: #{tpu_custom_call.1} parent=1 // loop_body
      %s26 = ssub.s32 %s21, 1
      %s27 = ssub.s32 %s21, 2
      %s28 = sadd.s32 %s21, 1
      %s29 = ssub.s32 %s21, %s28
      %p30 = scmp.eq.s32.totalorder %s29, 0
      %s32 = sadd.s32 %s31, 1
      %s33 = scalar_select %p30, %s31, %s32
      %p36 = pneg %p30
      %p37 = scmp.eq.s32.totalorder %s21, 1
      %p38 = por %p36, %p37
      %p39 = scmp.ne.s32.totalorder %s31, %s34
      %p40 = scmp.eq.s32.totalorder %s21, 0
      %p41 = por %p39, %p40
      %p42 = scmp.ne.s32.totalorder %s31, %s34
      %p43 = scmp.eq.s32.totalorder %s26, 1
      %p44 = por %p42, %p43
      %p45 = scmp.ne.s32.totalorder %s34, %s35
      %p46 = scmp.eq.s32.totalorder %s26, 0
      %p47 = por %p45, %p46
      %p48 = scmp.ne.s32.totalorder %s34, %s35
      %p49 = scmp.eq.s32.totalorder %s27, 1
      %p50 = por %p48, %p49
      %p52 = scmp.ne.s32.totalorder %s35, %s51
      %p53 = scmp.eq.s32.totalorder %s27, 0
      %p54 = por %p52, %p53
      %s55 = ssub.s32 %s21, %s28
      %p56 = scmp.eq.s32.totalorder %s55, 0
      %s58 = sadd.s32 %s57, 1
      %s59 = scalar_select %p56, %s57, %s58
      %p62 = pneg %p56
      %p63 = scmp.eq.s32.totalorder %s21, 1
      %p64 = por %p62, %p63
      %p65 = scmp.ne.s32.totalorder %s57, %s60
      %p66 = scmp.eq.s32.totalorder %s21, 0
      %p67 = por %p65, %p66
      %p68 = scmp.ne.s32.totalorder %s57, %s60
      %p69 = scmp.eq.s32.totalorder %s26, 1
      %p70 = por %p68, %p69
      %p71 = scmp.ne.s32.totalorder %s60, %s61
      %p72 = scmp.eq.s32.totalorder %s26, 0
      %p73 = por %p71, %p72
      %p74 = scmp.ne.s32.totalorder %s60, %s61
      %p75 = scmp.eq.s32.totalorder %s27, 1
      %p76 = por %p74, %p75
      %p78 = scmp.ne.s32.totalorder %s61, %s77
      %p79 = scmp.eq.s32.totalorder %s27, 0
      %p80 = por %p78, %p79
      %s81 = ssub.s32 %s21, %s28
      %p82 = scmp.eq.s32.totalorder %s81, 0
      %s84 = sadd.s32 %s83, 1
      %s85 = scalar_select %p82, %s83, %s84
      %p88 = pneg %p82
      %p89 = scmp.eq.s32.totalorder %s21, 1
      %p90 = por %p88, %p89
      %p91 = scmp.ne.s32.totalorder %s83, %s86
      %p92 = scmp.eq.s32.totalorder %s21, 0
      %p93 = por %p91, %p92
      %p94 = scmp.ne.s32.totalorder %s83, %s86
      %p95 = scmp.eq.s32.totalorder %s26, 1
      %p96 = por %p94, %p95
      %p97 = scmp.ne.s32.totalorder %s86, %s87
      %p98 = scmp.eq.s32.totalorder %s26, 0
      %p99 = por %p97, %p98
      %p100 = scmp.ne.s32.totalorder %s86, %s87
      %p101 = scmp.eq.s32.totalorder %s27, 1
      %p102 = por %p100, %p101
      %p104 = scmp.ne.s32.totalorder %s87, %s103
      %p105 = scmp.eq.s32.totalorder %s27, 0
      %p106 = por %p104, %p105
      %s107 = ssub.s32 %s21, %s28
      %p108 = scmp.eq.s32.totalorder %s107, 0
      %s110 = sadd.s32 %s109, 1
      %s111 = scalar_select %p108, %s109, %s110
      %p114 = pneg %p108
      %p115 = scmp.eq.s32.totalorder %s21, 1
      %p116 = por %p114, %p115
      %p117 = scmp.ne.s32.totalorder %s109, %s112
      %p118 = scmp.eq.s32.totalorder %s21, 0
      %p119 = por %p117, %p118
      %p120 = scmp.ne.s32.totalorder %s109, %s112
      %p121 = scmp.eq.s32.totalorder %s26, 1
      %p122 = por %p120, %p121
      %p123 = scmp.ne.s32.totalorder %s112, %s113
      %p124 = scmp.eq.s32.totalorder %s26, 0
      %p125 = por %p123, %p124
      %p126 = scmp.ne.s32.totalorder %s112, %s113
      %p127 = scmp.eq.s32.totalorder %s27, 1
      %p128 = por %p126, %p127
      %p130 = scmp.ne.s32.totalorder %s113, %s129
      %p131 = scmp.eq.s32.totalorder %s27, 0
      %p132 = por %p130, %p131
      %s133 = ssub.s32 %s21, %s28
      %p134 = scmp.eq.s32.totalorder %s133, 0
      %s136 = sadd.s32 %s135, 1
      %s137 = scalar_select %p134, %s135, %s136
      %p140 = pneg %p134
      %p141 = scmp.eq.s32.totalorder %s21, 1
      %p142 = por %p140, %p141
      %p143 = scmp.ne.s32.totalorder %s135, %s138
      %p144 = scmp.eq.s32.totalorder %s21, 0
      %p145 = por %p143, %p144
      %p146 = scmp.ne.s32.totalorder %s135, %s138
      %p147 = scmp.eq.s32.totalorder %s26, 1
      %p148 = por %p146, %p147
      %p149 = scmp.ne.s32.totalorder %s138, %s139
      %p150 = scmp.eq.s32.totalorder %s26, 0
      %p151 = por %p149, %p150
      %p152 = scmp.ne.s32.totalorder %s138, %s139
      %p153 = scmp.eq.s32.totalorder %s27, 1
      %p154 = por %p152, %p153
      %p156 = scmp.ne.s32.totalorder %s139, %s155
      %p157 = scmp.eq.s32.totalorder %s27, 0
      %p158 = por %p156, %p157
      %s159 = ssub.s32 %s21, %s28
      %p160 = scmp.eq.s32.totalorder %s159, 0
      %s162 = sadd.s32 %s161, 1
      %s163 = scalar_select %p160, %s161, %s162
      %p166 = pneg %p160
      %p167 = scmp.eq.s32.totalorder %s21, 1
      %p168 = por %p166, %p167
      %p169 = scmp.ne.s32.totalorder %s161, %s164
      %p170 = scmp.eq.s32.totalorder %s21, 0
      %p171 = por %p169, %p170
      %p172 = scmp.ne.s32.totalorder %s161, %s164
      %p173 = scmp.eq.s32.totalorder %s26, 1
      %p174 = por %p172, %p173
      %p175 = scmp.ne.s32.totalorder %s164, %s165
      %p176 = scmp.eq.s32.totalorder %s26, 0
      %p177 = por %p175, %p176
      %p178 = scmp.ne.s32.totalorder %s164, %s165
      %p179 = scmp.eq.s32.totalorder %s27, 1
      %p180 = por %p178, %p179
      %p182 = scmp.ne.s32.totalorder %s165, %s181
      %p183 = scmp.eq.s32.totalorder %s27, 0
      %p184 = por %p182, %p183
      %p185 = scmp.le.s32.totalorder 1, %s21
      %p186 = scmp.lt.s32.totalorder %s21, 3
      %p187 = pnand %p185, %p186
      %p188 = pneg %p187
      // Predicated region
      $region9: #{tpu_custom_call.1} parent=5 // pred_check
        _
      $region10: #{tpu_custom_call.1} parent=5 // pred_check_branch
        %190 = sbr.rel (%p187) target = $region12
      $region11: #{tpu_custom_call.1} parent=5 // pred_region
        %s191 = ssub.s32 %s21, 1
      $region12: #{tpu_custom_call.1} parent=5 // pred_fallthru
        _
      %p192 = scmp.lt.s32.totalorder %s21, 2
      // Predicated region
      $region13: #{tpu_custom_call.1} parent=5 // pred_check
        %p193 = pneg %p192
      $region14: #{tpu_custom_call.1} parent=5 // pred_check_branch
        %195 = sbr.rel (%p193) target = $region16
      $region15: #{tpu_custom_call.1} parent=5 // pred_region
        // Predicated region
        $region17: #{tpu_custom_call.1} parent=15 // pred_check
          %p196 = pneg %p41
        $region18: #{tpu_custom_call.1} parent=15 // pred_check_branch
          %198 = sbr.rel (%p196) target = $region20
        $region19: #{tpu_custom_call.1} parent=15 // pred_region
          %s199 = sand.u32 %s31, 1
          %s200 = scalar_lea.sflag [#allocation3], %s199
          %s201 = sand.u32 %s31, 1
          %s202 = smul.addr %s201, 8
          %s203 = scalar_lea.vmem [#allocation2], %s202
          %s205 = ssub.s32 128, 128
          %206 = vsyncadd %s200, %s205
          %s207 = smul.addr %s21, 128
          %s208 = scalar_lea.hbm %s0, %s207
          %s210 = sshll.u32 %s203, 4
          %s211 = int_to_ptr.vmem [resolvable:$true] %s210
          %213 = dma.hbm_to_vmem [thread:$0]  %s208, 128, %s211, %s200
        $region20: #{tpu_custom_call.1} parent=15 // pred_fallthru
          _
        // Predicated region
        $region21: #{tpu_custom_call.1} parent=15 // pred_check
          %p214 = pneg %p67
        $region22: #{tpu_custom_call.1} parent=15 // pred_check_branch
          %216 = sbr.rel (%p214) target = $region24
        $region23: #{tpu_custom_call.1} parent=15 // pred_region
          %p217 = scmp.lt.s32.totalorder %s21, 1
          %s218 = scalar_select %p217, %s21, 1
          %s219 = scalar_lea.vmem %s1, %s218
        $region24: #{tpu_custom_call.1} parent=15 // pred_fallthru
          _
        // Predicated region
        $region25: #{tpu_custom_call.1} parent=15 // pred_check
          %p220 = pneg %p93
        $region26: #{tpu_custom_call.1} parent=15 // pred_check_branch
          %222 = sbr.rel (%p220) target = $region28
        $region27: #{tpu_custom_call.1} parent=15 // pred_region
          %p223 = scmp.lt.s32.totalorder %s21, 1
          %s224 = scalar_select %p223, %s21, 1
          %s225 = scalar_lea.vmem %s2, %s224
        $region28: #{tpu_custom_call.1} parent=15 // pred_fallthru
          _
      $region16: #{tpu_custom_call.1} parent=5 // pred_fallthru
        _
      %p226 = scmp.le.s32.totalorder 1, %s21
      %p227 = scmp.lt.s32.totalorder %s21, 3
      %p228 = pnand %p226, %p227
      %p229 = pneg %p228
      // Predicated region
      $region29: #{tpu_custom_call.1} parent=5 // pred_check
        _
      $region30: #{tpu_custom_call.1} parent=5 // pred_check_branch
        %231 = sbr.rel (%p228) target = $region32
      $region31: #{tpu_custom_call.1} parent=5 // pred_region
        %s232 = ssub.s32 %s21, 1
        %s233 = sand.u32 %s34, 1
        %s234 = scalar_lea.sflag [#allocation3], %s233
        %s235 = sand.u32 %s34, 1
        %s236 = smul.addr %s235, 8
        %s237 = scalar_lea.vmem [#allocation2], %s236
        // Predicated region
        $region33: #{tpu_custom_call.1} parent=31 // pred_check
          %p238 = pneg %p47
        $region34: #{tpu_custom_call.1} parent=31 // pred_check_branch
          %240 = sbr.rel (%p238) target = $region36
        $region35: #{tpu_custom_call.1} parent=31 // pred_region
          %241 = dma.done %s234, 128
        $region36: #{tpu_custom_call.1} parent=31 // pred_fallthru
          _
        %s242 = sand.u32 %s34, 1
        %s243 = scalar_lea.sflag [#allocation3], %s242
        %s244 = sand.u32 %s34, 1
        %s245 = smul.addr %s244, 8
        %s246 = scalar_lea.vmem [#allocation2], %s245
        %p247 = pneg %p47
        %p248 = pneg %p44
        %p249 = scmp.lt.s32.totalorder %s26, 1
        %s250 = scalar_select %p249, %s26, 1
        %s251 = scalar_lea.vmem %s1, %s250
        %p252 = pneg %p73
        %p253 = pneg %p70
        %p254 = scmp.lt.s32.totalorder %s26, 1
        %s255 = scalar_select %p254, %s26, 1
        %s256 = scalar_lea.vmem %s2, %s255
        %p257 = pneg %p99
        %p258 = pneg %p96
        %p259 = pneg %p125
        %p260 = pneg %p122
        %s261 = sand.u32 %s112, 1
        %s262 = scalar_lea.sflag [#allocation4], %s261
        %s263 = sand.u32 %s112, 1
        %s264 = smul.addr %s263, 8
        %s265 = scalar_lea.vmem [#allocation5], %s264
        %p266 = pneg %p151
        %p267 = pneg %p148
        %s268 = sand.u32 %s26, 1
        %s269 = scalar_lea.sflag [#allocation7], %s268
        %s270 = sand.u32 %s138, 1
        %s271 = scalar_lea.vmem [#allocation6], %s270
        %p272 = pneg %p177
        %p273 = pneg %p174
        %s274 = sand.u32 %s26, 1
        %s275 = scalar_lea.sflag [#allocation7], %s274
        %s276 = sand.u32 %s164, 1
        %s277 = scalar_lea.vmem [#allocation8], %s276
        %p278 = scmp.lt.s32.totalorder %s26, 1
        %s279 = scalar_select %p278, %s26, 1
        %s280 = scalar_lea.vmem %s1, %s279
        %p281 = scmp.lt.s32.totalorder %s26, 1
        %s282 = scalar_select %p281, %s26, 1
        %s283 = scalar_lea.vmem %s2, %s282
        %284 = vst [vmem:[%s271] sm:$0x1] 0.0
        %285 = vst [vmem:[%s277] sm:$0x1] 0.0
        %v286 = vld [vmem:[%s237] sm:$0xff]
        %v287 = vld [vmem:[%s271] sm:$0x1]
        %v288 = vrot.slane %v286, 4
        %v289 = vadd.f32 %v286, %v288
        %v290 = vrot.slane %v289, 2
        %v291 = vadd.f32 %v289, %v290
        %v292 = vrot.slane %v291, 1
        %v293 = vadd.f32 %v291, %v292
        %v294 = vadd.f32 %v287, %v293
        %295 = vst [vmem:[%s271] sm:$0x1] %v294
        %v296 = vld [vmem:[%s277] sm:$0x1]
        %v297 = vmul.f32 %v286, %v286
        %v298 = vrot.slane %v297, 4
        %v299 = vadd.f32 %v297, %v298
        %v300 = vrot.slane %v299, 2
        %v301 = vadd.f32 %v299, %v300
        %v302 = vrot.slane %v301, 1
        %v303 = vadd.f32 %v301, %v302
        %v304 = vadd.f32 %v296, %v303
        %305 = vst [vmem:[%s277] sm:$0x1] %v304
        %v306 = vld [vmem:[%s271] sm:$0x1]
        %v307 = vrcp.pop 8.0
        %v308 = vmul.f32 %v306, %v307
        %v309 = vld [vmem:[%s277] sm:$0x1]
        %v310 = vmul.f32 %v308, 8.0
        %v311 = vmul.f32 %v310, %v308
        %v312 = vsub.f32 %v309, %v311
        %v313 = vrcp.pop 7.0
        %v314 = vmul.f32 %v312, %v313
        %v315 = vmax.f32 %v314, 0.0
        %316 = vst [vmem:[%s271] sm:$0x1] %v308
        %317 = vst [vmem:[%s277] sm:$0x1] %v315
        %v318 = vld [vmem:[%s280] sm:$0x1]
        %v319 = vadd.f32 %v315, 1e-05
        %v320 = vrsqrt.pop %v319
        %v321 = vmul.f32 %v318, %v320
        %v322 = vld [vmem:[%s283] sm:$0x1]
        %v323 = vmul.f32 %v308, %v321
        %v324 = vsub.f32 %v322, %v323
        %v325 = vld [vmem:[%s237] sm:$0xff]
        %v327 = vlaneseq
        %v328 = vshrl.u32 %v327, 7
        %v329 = vsub.s32 0, %v328
        %v330 = vrot.slane %v321, %v329
        %v332 = vmul.f32 %v325, %v330
        %v334 = vlaneseq
        %v335 = vshrl.u32 %v334, 7
        %v336 = vsub.s32 0, %v335
        %v337 = vrot.slane %v324, %v336
        %v339 = vadd.f32 %v332, %v337
        %340 = vst [vmem:[%s265] sm:$0xff] %v339
        %s341 = sand.u32 %s112, 1
        %s342 = scalar_lea.sflag [#allocation4], %s341
        %s343 = sand.u32 %s112, 1
        %s344 = smul.addr %s343, 8
        %s345 = scalar_lea.vmem [#allocation5], %s344
        %s346 = sand.u32 %s26, 1
        %s347 = scalar_lea.sflag [#allocation7], %s346
        %s348 = sand.u32 %s138, 1
        %s349 = scalar_lea.vmem [#allocation6], %s348
        %s350 = sand.u32 %s26, 1
        %s351 = scalar_lea.sflag [#allocation7], %s350
        %s352 = sand.u32 %s164, 1
        %s353 = scalar_lea.vmem [#allocation8], %s352
        // Predicated region
        $region37: #{tpu_custom_call.1} parent=31 // pred_check
          %p354 = pneg %p122
        $region38: #{tpu_custom_call.1} parent=31 // pred_check_branch
          %356 = sbr.rel (%p354) target = $region40
        $region39: #{tpu_custom_call.1} parent=31 // pred_region
          %s358 = ssub.s32 128, 128
          %359 = vsyncadd %s342, %s358
          %s360 = smul.addr %s26, 128
          %s361 = scalar_lea.hbm %s3, %s360
          %s363 = sshll.u32 %s345, 4
          %s364 = int_to_ptr.vmem [resolvable:$true] %s363
          %366 = dma.vmem_to_hbm [thread:$0]  %s364, 128, %s361, %s342
        $region40: #{tpu_custom_call.1} parent=31 // pred_fallthru
          _
        // Predicated region
        $region41: #{tpu_custom_call.1} parent=31 // pred_check
          %p367 = pneg %p148
        $region42: #{tpu_custom_call.1} parent=31 // pred_check_branch
          %369 = sbr.rel (%p367) target = $region44
        $region43: #{tpu_custom_call.1} parent=31 // pred_region
          %s371 = ssub.s32 16, 16
          %372 = vsyncadd %s347, %s371
          %s373 = smul.addr %s26, 16
          %s374 = scalar_lea.hbm %s4, %s373
          %s376 = sshll.u32 %s349, 4
          %s377 = int_to_ptr.vmem [resolvable:$true] %s376
          %379 = dma.vmem_to_hbm [thread:$0]  %s377, 16, %s374, %s347
        $region44: #{tpu_custom_call.1} parent=31 // pred_fallthru
          _
        // Predicated region
        $region45: #{tpu_custom_call.1} parent=31 // pred_check
          %p380 = pneg %p174
        $region46: #{tpu_custom_call.1} parent=31 // pred_check_branch
          %382 = sbr.rel (%p380) target = $region48
        $region47: #{tpu_custom_call.1} parent=31 // pred_region
          %s384 = ssub.s32 16, 16
          %385 = vsyncadd %s351, %s384
          %s386 = smul.addr %s26, 16
          %s387 = scalar_lea.hbm %s5, %s386
          %s389 = sshll.u32 %s353, 4
          %s390 = int_to_ptr.vmem [resolvable:$true] %s389
          %392 = dma.vmem_to_hbm [thread:$0]  %s390, 16, %s387, %s351
        $region48: #{tpu_custom_call.1} parent=31 // pred_fallthru
          _
      $region32: #{tpu_custom_call.1} parent=5 // pred_fallthru
        _
      %p393 = scmp.le.s32.totalorder 2, %s21
      // Predicated region
      $region49: #{tpu_custom_call.1} parent=5 // pred_check
        %p394 = pneg %p393
      $region50: #{tpu_custom_call.1} parent=5 // pred_check_branch
        %396 = sbr.rel (%p394) target = $region52
      $region51: #{tpu_custom_call.1} parent=5 // pred_region
        %s397 = ssub.s32 %s21, 2
        // Predicated region
        $region53: #{tpu_custom_call.1} parent=51 // pred_check
          %p398 = pneg %p128
        $region54: #{tpu_custom_call.1} parent=51 // pred_check_branch
          %400 = sbr.rel (%p398) target = $region56
        $region55: #{tpu_custom_call.1} parent=51 // pred_region
          %s401 = sand.u32 %s113, 1
          %s402 = scalar_lea.sflag [#allocation4], %s401
          %s403 = sand.u32 %s113, 1
          %s404 = smul.addr %s403, 8
          %s405 = scalar_lea.vmem [#allocation5], %s404
          %406 = dma.done %s402, 128
        $region56: #{tpu_custom_call.1} parent=51 // pred_fallthru
          _
        // Predicated region
        $region57: #{tpu_custom_call.1} parent=51 // pred_check
          %p407 = pneg %p154
        $region58: #{tpu_custom_call.1} parent=51 // pred_check_branch
          %409 = sbr.rel (%p407) target = $region60
        $region59: #{tpu_custom_call.1} parent=51 // pred_region
          %s410 = sand.u32 %s27, 1
          %s411 = scalar_lea.sflag [#allocation7], %s410
          %s412 = sand.u32 %s139, 1
          %s413 = scalar_lea.vmem [#allocation6], %s412
          %414 = dma.done %s411, 16
        $region60: #{tpu_custom_call.1} parent=51 // pred_fallthru
          _
        // Predicated region
        $region61: #{tpu_custom_call.1} parent=51 // pred_check
          %p415 = pneg %p180
        $region62: #{tpu_custom_call.1} parent=51 // pred_check_branch
          %417 = sbr.rel (%p415) target = $region64
        $region63: #{tpu_custom_call.1} parent=51 // pred_region
          %s418 = sand.u32 %s27, 1
          %s419 = scalar_lea.sflag [#allocation7], %s418
          %s420 = sand.u32 %s165, 1
          %s421 = scalar_lea.vmem [#allocation8], %s420
          %422 = dma.done %s419, 16
        $region64: #{tpu_custom_call.1} parent=51 // pred_fallthru
          _
      $region52: #{tpu_custom_call.1} parent=5 // pred_fallthru
        _
    $region6: #{tpu_custom_call.1} parent=1 // loop_footer
      %s25 = sadd.s32 1, %s21
    $region7: #{tpu_custom_call.1} parent=1 // loop_footer_branch
      %20 = sbr.rel target = $region3
    $region8: #{tpu_custom_call.1} parent=1 // loop_exit
      _
    %423 = vsyncpa [#allocation3], 1
    %s424 = scalar_lea.sflag [#allocation3], 1
    %425 = vsyncpa %s424, 1
    %426 = vsyncpa [#allocation4], 1
    %s427 = scalar_lea.sflag [#allocation4], 1
    %428 = vsyncpa %s427, 1
    %429 = vsyncpa [#allocation7], 1
    %s430 = scalar_lea.sflag [#allocation7], 1
    %431 = vsyncpa %s430, 1

</llo_original>
